<compile_context>
chip_gen: v5e
topology: v5e:2x2
jax: 0.10.0
libtpu: 0.0.40
codegen_flags: <defaults>
</compile_context>

<pallas_src>
import math

import jax
import jax.numpy as jnp
import numpy as np
from jax.experimental import pallas as pl
from jax.experimental.pallas import tpu as pltpu

LANES = 128        # lane-dense packing / padded output width
C1, C2 = 32, 64    # conv1 / conv2 output channels (fixed by the module)


def make_cnn_kernel(B, K, H1P, offs):
    """Full forward pass; static shapes. offs = packed-parameter row offsets."""
    o_w1, o_b1, o_w2, o_b2, o_w3, o_b3, o_wl, o_bl = offs
    rows = B * H1P

    def kernel(x_ref, p_ref, out_ref):
        # Static views into the packed parameter slab (one DMA for all params).
        w1 = p_ref[o_w1:o_w1 + K * 2, 0:C1]      # (K*2, 32)
        b1 = p_ref[o_b1:o_b1 + 1, 0:C1]          # (1, 32)
        w2 = p_ref[o_w2:o_w2 + K * C1, 0:C2]     # (K*32, 64)
        b2 = p_ref[o_b2:o_b2 + 1, 0:C2]          # (1, 64)
        w3 = p_ref[o_w3:o_w3 + 1, 0:C2]          # (1, 64)
        b3 = p_ref[o_b3:o_b3 + 1, 0:1]           # (1, 1)
        wl = p_ref[o_wl:o_wl + rows, :]          # (B*H1P, 128)  B-tiled, zero-padded
        bl = p_ref[o_bl:o_bl + 1, :]             # (1, 128)

        # conv1 + relu: one (B*H1P, K*2) @ (K*2, 32) matmul for the whole batch.
        x = x_ref[...]                           # wrapper-built im2col
        h1 = jnp.maximum(
            jnp.dot(x, w1, preferred_element_type=jnp.float32) + b1, 0.0)

        # conv2 + relu: in-kernel im2col.  Tap t is a sublane roll by t (XLU,
        # idle here); batch slabs are H1P rows apart so valid windows never
        # cross a batch boundary.  Lane-concat of the K taps fills a K*32-wide
        # contraction (== 128 for the default config) -> one MXU matmul.
        taps = [h1] + [pltpu.roll(h1, shift=rows - t, axis=0)
                       for t in range(1, K)]
        h1_col = jnp.concatenate(taps, axis=-1)                 # (B*H1P, K*32)
        h2 = jnp.maximum(
            jnp.dot(h1_col, w2, preferred_element_type=jnp.float32) + b2, 0.0)

        # conv3 (1x1 -> 1 channel) + relu: VPU multiply + lane reduction keeps
        # the MXU at exactly 2 pushes.
        h3 = jnp.maximum(
            jnp.sum(h2 * w3, axis=-1, keepdims=True) + b3, 0.0)  # (B*H1P, 1)

        # label Linear(3, OUT): sublane-segmented reduction against the
        # B-tiled weight slab (rows >= 3 of each slab are zero, masking the
        # padded / invalid conv rows).  Single lane-dense store.
        prod = h3 * wl                                           # (B*H1P, 128)
        logits = jnp.sum(prod.reshape(B, H1P, LANES), axis=1) + bl
        out_ref[...] = logits                                    # (B, 128)

    return kernel


def cnn_forward(x, params, feature_size, output_size):
    """x: (B, S, 2) float32, matching torch's input.view(B, 2, S, 1)."""
    w1, b1, w2, b2, w3, b3, wl, bl = params       # torch-shaped parameters
    B, S = x.shape[0], x.shape[1]
    K = (feature_size - 1) // 2 + 1
    H1 = S - K + 1
    H2 = H1 - K + 1
    assert H2 == 3, "Linear(3, output_size) requires S == 2*kernel_size + 1"
    assert output_size <= LANES
    H1P = ((H1 + 7) // 8) * 8                     # 8-aligned rows per batch slab

    # torch: input.view(B, 2, S, 1) is a reshape (NOT a transpose); then go
    # channels-last so channels sit on TPU lanes.
    x_bsc = jnp.transpose(x.reshape(B, 2, S), (0, 2, 1))          # (B, S, 2)

    # conv1 im2col (pure layout / gather, no compute): (B*H1P, K*2)
    widx = jnp.arange(H1)[:, None] + jnp.arange(K)[None, :]       # (H1, K)
    x_win = x_bsc[:, widx, :].reshape(B, H1, K * 2)               # (B, H1, K*2)
    x_col = jnp.pad(x_win, ((0, 0), (0, H1P - H1), (0, 0))
                    ).reshape(B * H1P, K * 2)

    # ---- pack every parameter into a single (R, 128) f32 slab (one DMA) ----
    w1_flat = jnp.transpose(w1[..., 0], (2, 1, 0)).reshape(K * 2, C1)   # (K*2, 32)
    w2_flat = jnp.transpose(w2[..., 0], (2, 1, 0)).reshape(K * C1, C2)  # (K*32, 64)
    w3_row = w3[:, :, 0, 0]                                             # (1, 64)
    wl_slab = jnp.pad(jnp.transpose(wl, (1, 0)),
                      ((0, H1P - H2), (0, 0)))                          # (H1P, OUT)
    wl_tiled = jnp.tile(wl_slab, (B, 1))                                # (B*H1P, OUT)

    segs = [w1_flat, b1.reshape(1, C1), w2_flat, b2.reshape(1, C2),
            w3_row, b3.reshape(1, 1), wl_tiled, bl.reshape(1, -1)]

    def pad_seg(a):                     # 8-aligned rows, 128 lanes
        r, c = a.shape
        return jnp.pad(a, ((0, (-r) % 8), (0, LANES - c)))

    padded = [pad_seg(s) for s in segs]
    offs, cur = [], 0
    for p in padded:
        offs.append(cur)
        cur += p.shape[0]
    pack = jnp.concatenate(padded, axis=0)                              # (R, 128)

    kernel = make_cnn_kernel(B, K, H1P, tuple(offs))
    vmem = pl.BlockSpec(memory_space=pltpu.MemorySpace.VMEM)
    # NOTE(v7x): if B grows, expose batch as a grid axis with
    # dimension_semantics=("parallel",) to use the second TensorCore; at this
    # size the grid-less form is best on all generations.
    out_padded = pl.pallas_call(
        kernel,
        out_shape=jax.ShapeDtypeStruct((B, LANES), jnp.float32),
        in_specs=[vmem, vmem],
        out_specs=vmem,
    )(x_col, pack)
    return out_padded[:, :output_size]


def init_params(key, feature_size, output_size):
    """Deterministic init matching the module's __init__ shapes/init scheme."""
    K = (feature_size - 1) // 2 + 1
    keys = jax.random.split(key, 5)

    def conv_init(k, shape):
        n_out, n_in, kh, kw = shape
        n = n_in * kh * kw
        scale = math.sqrt(2.0 / n) * math.sqrt(3.0)
        return jax.random.uniform(k, shape, jnp.float32, -scale, scale)

    w1 = conv_init(keys[0], (32, 2, K, 1)); b1 = jnp.zeros((32,), jnp.float32)
    w2 = conv_init(keys[1], (64, 32, K, 1)); b2 = jnp.zeros((64,), jnp.float32)
    w3 = conv_init(keys[2], (1, 64, 1, 1)); b3 = jnp.zeros((1,), jnp.float32)
    # `label` Linear(3, output_size) is NOT touched by _init_layers -> default
    # PyTorch-style uniform(-1/sqrt(in), 1/sqrt(in)) init.
    bound = 1.0 / math.sqrt(3.0)
    wl = jax.random.uniform(keys[3], (output_size, 3), jnp.float32, -bound, bound)
    bl = jax.random.uniform(keys[4], (output_size,), jnp.float32, -bound, bound)
    return (w1, b1, w2, b2, w3, b3, wl, bl)


def reference_forward(x, params):
    """Pure-JAX reference with lax conv, mirrors the torch forward exactly."""
    w1, b1, w2, b2, w3, b3, wl, bl = params
    B, S = x.shape[0], x.shape[1]
    z = x.reshape(B, 2, S, 1)

    def conv_relu(z, w, b):
        y = jax.lax.conv_general_dilated(
            z, w, window_strides=(1, 1), padding="VALID",
            dimension_numbers=("NCHW", "OIHW", "NCHW"))
        return jax.nn.relu(y + b[None, :, None, None])

    z = conv_relu(z, w1, b1)
    z = conv_relu(z, w2, b2)
    z = conv_relu(z, w3, b3)
    feat = z.reshape(B, z.shape[2])
    return feat @ wl.T + bl


if __name__ == "__main__":
    feature_size = 8           # -> kernel_size = 4
    output_size = 4
    B = 2
    K = (feature_size - 1) // 2 + 1
    S = 2 * K + 1              # conv-stack output length == 3 (Linear in-dim)

    key = jax.random.PRNGKey(0)
    kx, kp = jax.random.split(key)
    x = jax.random.normal(kx, (B, S, 2), jnp.float32)
    params = init_params(kp, feature_size, output_size)

    out = cnn_forward(x, params, feature_size, output_size)
    out = jax.block_until_ready(out)

    ref = reference_forward(x, params)
    assert out.shape == (B, output_size)
    np.testing.assert_allclose(np.asarray(out), np.asarray(ref),
                               rtol=1e-4, atol=1e-4)
    print("KERNEL_OK")
</pallas_src>

<mosaic_0001>
module attributes {stable_mosaic.version = 11 : i64} {
  func.func @kernel(%arg0: memref<16x8xf32, #tpu.memory_space<vmem>>, %arg1: memref<192x128xf32, #tpu.memory_space<vmem>>, %arg2: memref<2x128xf32, #tpu.memory_space<vmem>>) attributes {dimension_semantics = [], scalar_prefetch = 0 : i64, scratch_operands = 0 : i64, tpu.core_type = #tpu.core_type<tc>} {
    %c0 = arith.constant 0 : index
    %c0_0 = arith.constant 0 : index
    %0 = vector.load %arg1[%c0, %c0_0] : memref<192x128xf32, #tpu.memory_space<vmem>>, vector<8x32xf32>
    %c8 = arith.constant 8 : index
    %c0_1 = arith.constant 0 : index
    %1 = vector.load %arg1[%c8, %c0_1] : memref<192x128xf32, #tpu.memory_space<vmem>>, vector<1x32xf32>
    %c16 = arith.constant 16 : index
    %c0_2 = arith.constant 0 : index
    %2 = vector.load %arg1[%c16, %c0_2] : memref<192x128xf32, #tpu.memory_space<vmem>>, vector<128x64xf32>
    %c144 = arith.constant 144 : index
    %c0_3 = arith.constant 0 : index
    %3 = vector.load %arg1[%c144, %c0_3] : memref<192x128xf32, #tpu.memory_space<vmem>>, vector<1x64xf32>
    %c152 = arith.constant 152 : index
    %c0_4 = arith.constant 0 : index
    %4 = vector.load %arg1[%c152, %c0_4] : memref<192x128xf32, #tpu.memory_space<vmem>>, vector<1x64xf32>
    %c160 = arith.constant 160 : index
    %c0_5 = arith.constant 0 : index
    %5 = vector.load %arg1[%c160, %c0_5] : memref<192x128xf32, #tpu.memory_space<vmem>>, vector<1x1xf32>
    %c168 = arith.constant 168 : index
    %c0_6 = arith.constant 0 : index
    %6 = vector.load %arg1[%c168, %c0_6] : memref<192x128xf32, #tpu.memory_space<vmem>>, vector<16x128xf32>
    %c184 = arith.constant 184 : index
    %c0_7 = arith.constant 0 : index
    %7 = vector.load %arg1[%c184, %c0_7] : memref<192x128xf32, #tpu.memory_space<vmem>>, vector<1x128xf32>
    %c0_8 = arith.constant 0 : index
    %c0_9 = arith.constant 0 : index
    %8 = vector.load %arg0[%c0_8, %c0_9] : memref<16x8xf32, #tpu.memory_space<vmem>>, vector<16x8xf32>
    %cst = arith.constant dense<0.000000e+00> : vector<16x32xf32>
    %9 = tpu.matmul %8, %0, %cst {dimension_numbers = #tpu.dot_dimension_numbers<[1], [0], [0], [1], [0, 0, 1, 1], [], []>} : vector<16x8xf32>, vector<8x32xf32>, vector<16x32xf32> -> vector<16x32xf32>
    %10 = vector.broadcast %1 : vector<1x32xf32> to vector<16x32xf32>
    %11 = arith.addf %9, %10 : vector<16x32xf32>
    %cst_10 = arith.constant 0.000000e+00 : f32
    %12 = vector.broadcast %cst_10 : f32 to vector<16x32xf32>
    %13 = arith.maximumf %11, %12 : vector<16x32xf32>
    %c15_i32 = arith.constant 15 : i32
    %14 = tpu.dynamic_rotate %13 by %c15_i32 dim 0 : vector<16x32xf32>, i32 -> vector<16x32xf32>
    %c14_i32 = arith.constant 14 : i32
    %15 = tpu.dynamic_rotate %13 by %c14_i32 dim 0 : vector<16x32xf32>, i32 -> vector<16x32xf32>
    %c13_i32 = arith.constant 13 : i32
    %16 = tpu.dynamic_rotate %13 by %c13_i32 dim 0 : vector<16x32xf32>, i32 -> vector<16x32xf32>
    %17 = tpu.concatenate %13, %14, %15, %16 in 1 : vector<16x32xf32>, vector<16x32xf32>, vector<16x32xf32>, vector<16x32xf32> -> vector<16x128xf32>
    %cst_11 = arith.constant dense<0.000000e+00> : vector<16x64xf32>
    %18 = tpu.matmul %17, %2, %cst_11 {dimension_numbers = #tpu.dot_dimension_numbers<[1], [0], [0], [1], [0, 0, 1, 1], [], []>} : vector<16x128xf32>, vector<128x64xf32>, vector<16x64xf32> -> vector<16x64xf32>
    %19 = vector.broadcast %3 : vector<1x64xf32> to vector<16x64xf32>
    %20 = arith.addf %18, %19 : vector<16x64xf32>
    %cst_12 = arith.constant 0.000000e+00 : f32
    %21 = vector.broadcast %cst_12 : f32 to vector<16x64xf32>
    %22 = arith.maximumf %20, %21 : vector<16x64xf32>
    %23 = vector.broadcast %4 : vector<1x64xf32> to vector<16x64xf32>
    %24 = arith.mulf %22, %23 : vector<16x64xf32>
    %cst_13 = arith.constant dense<0.000000e+00> : vector<16xf32>
    %25 = vector.multi_reduction <add>, %24, %cst_13 [1] : vector<16x64xf32> to vector<16xf32>
    %26 = vector.shape_cast %25 : vector<16xf32> to vector<16x1xf32>
    %27 = vector.broadcast %5 : vector<1x1xf32> to vector<16x1xf32>
    %28 = arith.addf %26, %27 : vector<16x1xf32>
    %cst_14 = arith.constant 0.000000e+00 : f32
    %29 = vector.broadcast %cst_14 : f32 to vector<16x1xf32>
    %30 = arith.maximumf %28, %29 : vector<16x1xf32>
    %31 = vector.broadcast %30 : vector<16x1xf32> to vector<16x128xf32>
    %32 = arith.mulf %31, %6 : vector<16x128xf32>
    %33 = vector.shape_cast %32 : vector<16x128xf32> to vector<2x8x128xf32>
    %cst_15 = arith.constant dense<0.000000e+00> : vector<2x128xf32>
    %34 = vector.multi_reduction <add>, %33, %cst_15 [1] : vector<2x8x128xf32> to vector<2x128xf32>
    %35 = vector.broadcast %7 : vector<1x128xf32> to vector<2x128xf32>
    %36 = arith.addf %34, %35 : vector<2x128xf32>
    %c0_16 = arith.constant 0 : index
    %c0_17 = arith.constant 0 : index
    %37 = vector.load %arg2[%c0_16, %c0_17] : memref<2x128xf32, #tpu.memory_space<vmem>>, vector<2x128xf32>
    tpu.vector_store %arg2[%c0_16, %c0_17], %36 {strides = array<i32>} : memref<2x128xf32, #tpu.memory_space<vmem>>, vector<2x128xf32>,
    return
  }
}

</mosaic_0001>

<llo_original>
// kernel: tpu_custom_call.1
$region0: #{tpu_custom_call.1}
  #allocation0 [shape = 'u32[]', space=smem, size = 0x4, offset = 0x4, fixed_abs, tag = 'smem constant byte address 0x4 - core index']
  #allocation1 [shape = 'u32[72,128]{1,0:T(1,128)}', space=vmem, size = 0x9000, scoped, tag = 'internal scratch']
  %s0 = inlined_call_operand.vmem [shape: f32[16,8], index: 0, kind: input, shape index: {}]
  %s1 = inlined_call_operand.hbm [shape: f32[192,128], index: 1, kind: input, shape index: {}]
  %s2 = inlined_call_operand.hbm [shape: f32[2,128], index: 2, kind: output, shape index: {}]
  %s3 = sld [smem:[#allocation0]]
  $region22: #{tpu_custom_call.1} parent=0
    _
  %s5 = ssub.s32 1, %s3
  %s6 = scalar_select 0, %s5, %s3
  $region1: #{tpu_custom_call.1} parent=0
    #allocation2 [shape = 'u8[98304]{0}', space=vmem, size = 0x18000, scoped, tag = 'input window, operand 1, single buffered']
    #allocation3 [shape = 's32[1]{0}', space=sflag, size = 0x4, scoped, tag = 'scoped memory for tpu_custom_call.1']
    #allocation4 [shape = 's32[1]{0}', space=sflag, size = 0x4, scoped, tag = 'scoped memory for tpu_custom_call.1']
    #allocation5 [shape = 'u8[1024]{0}', space=vmem, size = 0x400, scoped, tag = 'output window, operand 0, single buffered']
    %7 = vsyncpa [#allocation3], 0
    %8 = vsyncpa [#allocation4], 0
    // Predicated region
    $region2: #{tpu_custom_call.1} parent=1 // pred_check
      _
    $region3: #{tpu_custom_call.1} parent=1 // pred_check_branch
      %10 = sbr.rel (0) target = $region5
    $region4: #{tpu_custom_call.1} parent=1 // pred_region
      _
    $region5: #{tpu_custom_call.1} parent=1 // pred_fallthru
      _
    // Predicated region
    $region6: #{tpu_custom_call.1} parent=1 // pred_check
      _
    $region7: #{tpu_custom_call.1} parent=1 // pred_check_branch
      %12 = sbr.rel (0) target = $region9
    $region8: #{tpu_custom_call.1} parent=1 // pred_region
      %14 = vsyncadd [#allocation3], 0
      %s15 = sshll.u32 %s1, 4
      %s16 = int_to_ptr.hbm [resolvable:$true] %s15
      %s17 = sshll.u32 [#allocation2], 4
      %s18 = int_to_ptr.vmem [resolvable:$true] %s17
      %23 = dma.hbm_to_vmem [thread:$0]  %s16, 3072, %s18, [#allocation3], 128, 128, 8
    $region9: #{tpu_custom_call.1} parent=1 // pred_fallthru
      _
    // Predicated region
    $region10: #{tpu_custom_call.1} parent=1 // pred_check
      _
    $region11: #{tpu_custom_call.1} parent=1 // pred_check_branch
      %25 = sbr.rel (0) target = $region13
    $region12: #{tpu_custom_call.1} parent=1 // pred_region
      %27 = dma.done [#allocation3], 3072
    $region13: #{tpu_custom_call.1} parent=1 // pred_fallthru
      _
    %v28 = vld [vmem:[#allocation2] sm:$0xff]
    %v29 = vld [vmem:[#allocation2 + $0x8] sm:$0x1]
    %v30 = vld [vmem:[#allocation2 + $0x10] sm:$0xff]
    %v31 = vld [vmem:[#allocation2 + $0x18] sm:$0xff]
    %v32 = vld [vmem:[#allocation2 + $0x20] sm:$0xff]
    %v33 = vld [vmem:[#allocation2 + $0x28] sm:$0xff]
    %v34 = vld [vmem:[#allocation2 + $0x30] sm:$0xff]
    %v35 = vld [vmem:[#allocation2 + $0x38] sm:$0xff]
    %v36 = vld [vmem:[#allocation2 + $0x40] sm:$0xff]
    %v37 = vld [vmem:[#allocation2 + $0x48] sm:$0xff]
    %v38 = vld [vmem:[#allocation2 + $0x50] sm:$0xff]
    %v39 = vld [vmem:[#allocation2 + $0x58] sm:$0xff]
    %v40 = vld [vmem:[#allocation2 + $0x60] sm:$0xff]
    %v41 = vld [vmem:[#allocation2 + $0x68] sm:$0xff]
    %v42 = vld [vmem:[#allocation2 + $0x70] sm:$0xff]
    %v43 = vld [vmem:[#allocation2 + $0x78] sm:$0xff]
    %v44 = vld [vmem:[#allocation2 + $0x80] sm:$0xff]
    %v45 = vld [vmem:[#allocation2 + $0x88] sm:$0xff]
    %v46 = vld [vmem:[#allocation2 + $0x90] sm:$0x1]
    %v47 = vld [vmem:[#allocation2 + $0x98] sm:$0x1]
    %v48 = vld [vmem:[#allocation2 + $0xa0] sm:$0x1]
    %v49 = vld [vmem:[#allocation2 + $0xa8] sm:$0xff]
    %v50 = vld [vmem:[#allocation2 + $0xb0] sm:$0xff]
    %v51 = vld [vmem:[#allocation2 + $0xb8] sm:$0x1]
    %v52 = vld [vmem:[%s0] sm:$0xff]
    %v53 = vld [vmem:[%s0 + $0x8] sm:$0xff]
    %v54 = vperm.slane %v29, 0
    %vm55 = vcmask 64512
    %v57 = vsel %vm55, %v52, 0
    %v60 = vsel %vm55, %v53, 0
    %62 = vmatpush.msra.mxu0 0.0
    %63 = vmatpush.msra.mxu0 0.0
    %64 = vmatpush.msra.mxu0 0.0
    %65 = vmatpush.msra.mxu0 0.0
    %66 = vmatpush.msra.mxu0 0.0
    %67 = vmatpush.msra.mxu0 0.0
    %68 = vmatpush.msra.mxu0 0.0
    %69 = vmatpush.msra.mxu0 0.0
    %70 = vmatpush.msra.mxu0 0.0
    %71 = vmatpush.msra.mxu0 0.0
    %72 = vmatpush.msra.mxu0 0.0
    %73 = vmatpush.msra.mxu0 0.0
    %74 = vmatpush.msra.mxu0 0.0
    %75 = vmatpush.msra.mxu0 0.0
    %76 = vmatpush.msra.mxu0 0.0
    %77 = vmatpush.msra.mxu0 %v28
    %78 = vmatmul.f32.gmra.mxu0 %v57
    %v79 = vpop.f32.mrf.mxu0
    %v80 = vadd.f32 %v54, %v79
    %81 = vmatmul.f32.gmra.mxu0 %v60
    %v82 = vpop.f32.mrf.mxu0
    %v83 = vadd.f32 %v54, %v82
    %84 = vdwg.mxu0
    %v85 = vmax.f32 %v80, 0.0
    %v86 = vmax.f32 %v83, 0.0
    %v87 = vrot.slane %v85, 1
    %v88 = vrot.slane %v86, 1
    %v89 = vlaneseq
    %v90 = vshrl.u32 %v89, 7
    %vm91 = vcmp.lt.s32.totalorder %v90, 7
    %v92 = vsel %vm91, %v87, %v88
    %v93 = vsel %vm91, %v88, %v87
    %v94 = vrot.slane %v85, 2
    %v95 = vrot.slane %v86, 2
    %vm96 = vcmp.lt.s32.totalorder %v90, 6
    %v97 = vsel %vm96, %v94, %v95
    %v98 = vsel %vm96, %v95, %v94
    %v99 = vrot.slane %v85, 3
    %v100 = vrot.slane %v86, 3
    %vm101 = vcmp.lt.s32.totalorder %v90, 5
    %v102 = vsel %vm101, %v99, %v100
    %v103 = vsel %vm101, %v100, %v99
    %106 = vrot.lane.b32.xlu0 %v92, 32
    %v107 = vpop.permute.xlu0 %106
    %108 = vrot.lane.b32.xlu0 %v93, 32
    %v109 = vpop.permute.xlu0 %108
    %114 = vrot.lane.b32.xlu0 %v97, 64
    %v115 = vpop.permute.xlu0 %114
    %116 = vrot.lane.b32.xlu0 %v98, 64
    %v117 = vpop.permute.xlu0 %116
    %122 = vrot.lane.b32.xlu0 %v102, 96
    %v123 = vpop.permute.xlu0 %122
    %124 = vrot.lane.b32.xlu0 %v103, 96
    %v125 = vpop.permute.xlu0 %124
    %vm128 = vcmask 261120
    %v129 = vsel %vm128, %v85, %v107
    %v130 = vsel %vm128, %v86, %v109
    %vm131 = vcmask 523264
    %v132 = vsel %vm131, %v129, %v115
    %v133 = vsel %vm131, %v130, %v117
    %vm134 = vcmask 785408
    %v135 = vsel %vm134, %v132, %v123
    %v136 = vsel %vm134, %v133, %v125
    %v137 = vperm.slane %v46, 0
    %138 = vmatpush.msra.mxu0 %v45
    %139 = vmatpush.msra.mxu0 %v44
    %140 = vmatpush.msra.mxu0 %v43
    %141 = vmatpush.msra.mxu0 %v42
    %142 = vmatpush.msra.mxu0 %v41
    %143 = vmatpush.msra.mxu0 %v40
    %144 = vmatpush.msra.mxu0 %v39
    %145 = vmatpush.msra.mxu0 %v38
    %146 = vmatpush.msra.mxu0 %v37
    %147 = vmatpush.msra.mxu0 %v36
    %148 = vmatpush.msra.mxu0 %v35
    %149 = vmatpush.msra.mxu0 %v34
    %150 = vmatpush.msra.mxu0 %v33
    %151 = vmatpush.msra.mxu0 %v32
    %152 = vmatpush.msra.mxu0 %v31
    %153 = vmatpush.msra.mxu0 %v30
    %154 = vmatmul.f32.gmra.mxu0 %v135
    %v155 = vpop.f32.mrf.mxu0
    %v156 = vadd.f32 %v137, %v155
    %157 = vmatmul.f32.gmra.mxu0 %v136
    %v158 = vpop.f32.mrf.mxu0
    %v159 = vadd.f32 %v137, %v158
    %160 = vdwg.mxu0
    %v161 = vmax.f32 %v156, 0.0
    %v162 = vmax.f32 %v159, 0.0
    %v163 = vperm.slane %v47, 0
    %v164 = vmul.f32 %v161, %v163
    %v165 = vmul.f32 %v162, %v163
    %v166 = vsel %vm131, %v164, 0.0
    %167 = vadd.xlane.f32.xlu0 %v166
    %v168 = vpop.xlane.xlu0 %167
    %v169 = vsel %vm131, %v165, 0.0
    %170 = vadd.xlane.f32.xlu0 %v169
    %v171 = vpop.xlane.xlu0 %170
    %v172 = vperm.slane %v48, 0
    %v173 = vadd.f32 %v168, %v172
    %v174 = vadd.f32 %v171, %v172
    %v175 = vmax.f32 %v173, 0.0
    %v176 = vmax.f32 %v174, 0.0
    %178 = vset.pattern.permute.xlu0 0
    %179 = vperm.xlu0 %178, %v175
    %v180 = vpop.permute.xlu0 %179
    %183 = vset.pattern.permute.xlu0 0
    %184 = vperm.xlu0 %183, %v176
    %v185 = vpop.permute.xlu0 %184
    %v187 = vmul.f32 %v180, %v49
    %v188 = vmul.f32 %v185, %v50
    %v189 = vrot.slane %v187, 4
    %v190 = vadd.f32 %v187, %v189
    %v191 = vrot.slane %v190, 2
    %v192 = vadd.f32 %v190, %v191
    %v193 = vrot.slane %v192, 1
    %v194 = vadd.f32 %v192, %v193
    %v195 = vrot.slane %v188, 4
    %v196 = vadd.f32 %v188, %v195
    %v197 = vrot.slane %v196, 2
    %v198 = vadd.f32 %v196, %v197
    %v199 = vrot.slane %v198, 1
    %v200 = vadd.f32 %v198, %v199
    %v201 = vperm.slane %v51, 0
    %v202 = vadd.f32 %v194, %v201
    %v203 = vadd.f32 %v200, %v201
    %v206 = vrot.slane %v203, 7
    %vm207 = vcmask 1041409
    %v208 = vsel %vm207, %v206, %v202
    %210 = vst [vmem:[#allocation5] sm:$0x3] %v208
    // Predicated region
    $region14: #{tpu_custom_call.1} parent=1 // pred_check
      _
    $region15: #{tpu_custom_call.1} parent=1 // pred_check_branch
      %212 = sbr.rel (0) target = $region17
    $region16: #{tpu_custom_call.1} parent=1 // pred_region
      %214 = vsyncadd [#allocation4], 0
      %s216 = sshll.u32 [#allocation5], 4
      %s217 = int_to_ptr.vmem [resolvable:$true] %s216
      %s218 = sshll.u32 %s2, 4
      %s219 = int_to_ptr.hbm [resolvable:$true] %s218
      %221 = dma.vmem_to_hbm [thread:$0]  %s217, 32, %s219, [#allocation4]
    $region17: #{tpu_custom_call.1} parent=1 // pred_fallthru
      _
    // Predicated region
    $region18: #{tpu_custom_call.1} parent=1 // pred_check
      _
    $region19: #{tpu_custom_call.1} parent=1 // pred_check_branch
      %223 = sbr.rel (0) target = $region21
    $region20: #{tpu_custom_call.1} parent=1 // pred_region
      %225 = dma.done [#allocation4], 32
    $region21: #{tpu_custom_call.1} parent=1 // pred_fallthru
      _
    %226 = vsyncpa [#allocation3], 1
    %227 = vsyncpa [#allocation4], 1

</llo_original>
